<compile_context>
chip_gen: v7x
topology: tpu7x:2x2x1
jax: 0.10.0
libtpu: 0.0.40
codegen_flags: <defaults>
</compile_context>

<pallas_src>
import jax
import jax.numpy as jnp
from jax.experimental import pallas as pl
from jax.experimental.pallas import tpu as pltpu


def _round_up(x, m):
    return ((x + m - 1) // m) * m


def _head_kernel(x_ref, w_ref, b_ref, o_ref):
    # x_ref: (TN, D) bf16    w_ref: (D, V) bf16 (resident across N-tiles)
    # b_ref: (1, V)  f32     o_ref: (TN, V)
    # Linear: logits = x @ W + b, accumulated in f32 on the MXU.
    logits = jnp.dot(x_ref[...], w_ref[...], preferred_element_type=jnp.float32)
    logits = logits + b_ref[...]  # f32 broadcast over rows

    # Numerically stable log_softmax over the last dim, all in f32.
    m = jnp.max(logits, axis=-1, keepdims=True)
    shifted = logits - m
    lse = jnp.log(jnp.sum(jnp.exp(shifted), axis=-1, keepdims=True))
    o_ref[...] = (shifted - lse).astype(o_ref.dtype)


def generator_forward(x, weights, biases, *, compute_dtype=jnp.bfloat16,
                      out_dtype=jnp.float32, row_tile=256):
    """Per-instrument Linear + log_softmax.

    Args:
      x:       (4, B, S, D) float32 hidden states.
      weights: (4, D, V)    float32 per-instrument Linear weights
                             (transposed vs. torch's (V, D) storage).
      biases:  (4, 1, V)    float32 per-instrument Linear biases.
    Returns:
      (4, B, S, V) log-probabilities in `out_dtype`.
    """
    inst, B, S, D = x.shape
    V = weights.shape[-1]
    N = B * S

    # Row tile: multiple of 8 (sublane), capped by row_tile; pad N up to a
    # whole number of tiles so every block is full-sized.
    TN = min(row_tile, _round_up(N, 8))
    N_pad = _round_up(N, TN)
    n_tiles = N_pad // TN

    x2 = x.reshape(inst, N, D).astype(compute_dtype)
    if N_pad != N:
        x2 = jnp.pad(x2, ((0, 0), (0, N_pad - N), (0, 0)))
    w = weights.astype(compute_dtype)
    b = biases.reshape(inst, 1, V).astype(jnp.float32)

    # Explicit VMEM budget: double-buffered x tile + out tile, resident weight
    # (x2 across instrument switches), bias, f32 logits working set.
    in_size = jnp.dtype(compute_dtype).itemsize
    out_size = jnp.dtype(out_dtype).itemsize
    vmem_est = (2 * TN * D * in_size + 2 * D * V * in_size + 2 * V * 4
                + 2 * TN * V * out_size + 2 * TN * V * 4)
    vmem_limit = int(min(64 * 2 ** 20, max(32 * 2 ** 20, 2 * vmem_est)))

    out = pl.pallas_call(
        _head_kernel,
        out_shape=jax.ShapeDtypeStruct((inst, N_pad, V), out_dtype),
        grid_spec=pltpu.PrefetchScalarGridSpec(
            num_scalar_prefetch=0,
            grid=(inst, n_tiles),  # instrument outer, N-tile inner
            in_specs=[
                pl.BlockSpec((None, TN, D), lambda i, n: (i, n, 0)),  # x tile
                pl.BlockSpec((None, D, V), lambda i, n: (i, 0, 0)),   # W[i] resident
                pl.BlockSpec((None, 1, V), lambda i, n: (i, 0, 0)),   # b[i] resident
            ],
            out_specs=pl.BlockSpec((None, TN, V), lambda i, n: (i, n, 0)),
        ),
        compiler_params=pltpu.CompilerParams(
            dimension_semantics=("parallel", "parallel"),
            vmem_limit_bytes=vmem_limit,
        ),
    )(x2, w, b)

    if N_pad != N:
        out = out[:, :N, :]
    return out.reshape(inst, B, S, V)


if __name__ == "__main__":
    # Small shapes consistent with the module's forward:
    #   4 instruments, batch=2, seq=8, d_model=32, vocab=128
    B, S, D, V = 2, 8, 32, 128

    key = jax.random.PRNGKey(0)
    kx, kw, kb = jax.random.split(key, 3)

    x = jax.random.normal(kx, (4, B, S, D), dtype=jnp.float32)
    weights = jax.random.normal(kw, (4, D, V), dtype=jnp.float32) * (1.0 / jnp.sqrt(D))
    biases = jax.random.normal(kb, (4, 1, V), dtype=jnp.float32) * 0.01

    out = generator_forward(x, weights, biases)
    out = jax.block_until_ready(out)

    # Reference in plain JAX, using the same bf16-rounded inputs as the kernel
    # (f32 accumulation both ways, so the comparison is tight).
    xr = x.astype(jnp.bfloat16).astype(jnp.float32)
    wr = weights.astype(jnp.bfloat16).astype(jnp.float32)
    logits_ref = jnp.einsum("ibsd,idv->ibsv", xr, wr,
                            precision=jax.lax.Precision.HIGHEST)
    logits_ref = logits_ref + biases[:, None, :, :]
    ref = jax.nn.log_softmax(logits_ref, axis=-1)

    assert out.shape == (4, B, S, V)
    assert out.dtype == jnp.float32
    max_err = float(jnp.max(jnp.abs(out - ref)))
    assert jnp.allclose(out, ref, atol=1e-3, rtol=1e-3), max_err

    print("KERNEL_OK")
</pallas_src>

<mosaic_0001>
module attributes {stable_mosaic.version = 11 : i64} {
  func.func @_head_kernel(%arg0: i32, %arg1: i32, %arg2: memref<1x16x32xbf16, #tpu.memory_space<vmem>>, %arg3: memref<1x32x128xbf16, #tpu.memory_space<vmem>>, %arg4: memref<1x1x128xf32, #tpu.memory_space<vmem>>, %arg5: memref<1x16x128xf32, #tpu.memory_space<vmem>>) attributes {dimension_semantics = [#tpu.dimension_semantics<parallel>, #tpu.dimension_semantics<parallel>], iteration_bounds = array<i64: 4, 1>, scalar_prefetch = 0 : i64, scratch_operands = 0 : i64, tpu.core_type = #tpu.core_type<tc>, window_params = [{transform_indices = @transform_0, window_bounds = array<i64: 1, 16, 32>}, {transform_indices = @transform_1, window_bounds = array<i64: 1, 32, 128>}, {transform_indices = @transform_2, window_bounds = array<i64: 1, 1, 128>}, {transform_indices = @transform_3, window_bounds = array<i64: 1, 16, 128>}]} {
    %c0 = arith.constant 0 : index
    %c0_0 = arith.constant 0 : index
    %c0_1 = arith.constant 0 : index
    %0 = vector.load %arg2[%c0, %c0_0, %c0_1] : memref<1x16x32xbf16, #tpu.memory_space<vmem>>, vector<1x16x32xbf16>
    %1 = vector.shape_cast %0 : vector<1x16x32xbf16> to vector<16x32xbf16>
    %c0_2 = arith.constant 0 : index
    %c0_3 = arith.constant 0 : index
    %c0_4 = arith.constant 0 : index
    %2 = vector.load %arg3[%c0_2, %c0_3, %c0_4] : memref<1x32x128xbf16, #tpu.memory_space<vmem>>, vector<1x32x128xbf16>
    %3 = vector.shape_cast %2 : vector<1x32x128xbf16> to vector<32x128xbf16>
    %cst = arith.constant dense<0.000000e+00> : vector<16x128xf32>
    %4 = tpu.matmul %1, %3, %cst {dimension_numbers = #tpu.dot_dimension_numbers<[1], [0], [0], [1], [0, 0, 1, 1], [], []>} : vector<16x32xbf16>, vector<32x128xbf16>, vector<16x128xf32> -> vector<16x128xf32>
    %c0_5 = arith.constant 0 : index
    %c0_6 = arith.constant 0 : index
    %c0_7 = arith.constant 0 : index
    %5 = vector.load %arg4[%c0_5, %c0_6, %c0_7] : memref<1x1x128xf32, #tpu.memory_space<vmem>>, vector<1x1x128xf32>
    %6 = vector.shape_cast %5 : vector<1x1x128xf32> to vector<1x128xf32>
    %7 = vector.broadcast %6 : vector<1x128xf32> to vector<16x128xf32>
    %8 = arith.addf %4, %7 : vector<16x128xf32>
    %cst_8 = arith.constant dense<0xFF800000> : vector<16xf32>
    %9 = vector.multi_reduction <maximumf>, %8, %cst_8 [1] : vector<16x128xf32> to vector<16xf32>
    %10 = vector.shape_cast %9 : vector<16xf32> to vector<16x1xf32>
    %11 = vector.broadcast %10 : vector<16x1xf32> to vector<16x128xf32>
    %12 = arith.subf %8, %11 : vector<16x128xf32>
    %13 = math.exp %12 : vector<16x128xf32>
    %cst_9 = arith.constant dense<0.000000e+00> : vector<16xf32>
    %14 = vector.multi_reduction <add>, %13, %cst_9 [1] : vector<16x128xf32> to vector<16xf32>
    %15 = vector.shape_cast %14 : vector<16xf32> to vector<16x1xf32>
    %16 = math.log %15 : vector<16x1xf32>
    %17 = vector.broadcast %16 : vector<16x1xf32> to vector<16x128xf32>
    %18 = arith.subf %12, %17 : vector<16x128xf32>
    %c0_10 = arith.constant 0 : index
    %c0_11 = arith.constant 0 : index
    %c0_12 = arith.constant 0 : index
    %19 = vector.load %arg5[%c0_10, %c0_11, %c0_12] : memref<1x16x128xf32, #tpu.memory_space<vmem>>, vector<1x16x128xf32>
    %20 = vector.shape_cast %19 : vector<1x16x128xf32> to vector<16x128xf32>
    %21 = vector.shape_cast %18 : vector<16x128xf32> to vector<1x16x128xf32>
    tpu.vector_store %arg5[%c0_10, %c0_11, %c0_12], %21 {strides = array<i32>} : memref<1x16x128xf32, #tpu.memory_space<vmem>>, vector<1x16x128xf32>,
    return
  }
  func.func @transform_0(%arg0: i32, %arg1: i32) -> (i32, i32, i32) {
    %c0_i32 = arith.constant 0 : i32
    %c0_i32_0 = arith.constant 0 : i32
    return %arg0, %arg1, %c0_i32 : i32, i32, i32
  }
  func.func @transform_1(%arg0: i32, %arg1: i32) -> (i32, i32, i32) {
    %c0_i32 = arith.constant 0 : i32
    %c0_i32_0 = arith.constant 0 : i32
    %c0_i32_1 = arith.constant 0 : i32
    return %arg0, %c0_i32, %c0_i32_0 : i32, i32, i32
  }
  func.func @transform_2(%arg0: i32, %arg1: i32) -> (i32, i32, i32) {
    %c0_i32 = arith.constant 0 : i32
    %c0_i32_0 = arith.constant 0 : i32
    %c0_i32_1 = arith.constant 0 : i32
    return %arg0, %c0_i32, %c0_i32_0 : i32, i32, i32
  }
  func.func @transform_3(%arg0: i32, %arg1: i32) -> (i32, i32, i32) {
    %c0_i32 = arith.constant 0 : i32
    %c0_i32_0 = arith.constant 0 : i32
    return %arg0, %arg1, %c0_i32 : i32, i32, i32
  }
}

</mosaic_0001>

<llo_original>
// kernel: tpu_custom_call.1
$region0: #{tpu_custom_call.1}
  #allocation0 [shape = 'u32[]', space=smem, size = 0x4, offset = 0x4, fixed_abs, tag = 'smem constant byte address 0x4 - core index']
  #allocation1 [shape = 'u32[144,128]{1,0:T(1,128)}', space=vmem, size = 0x12000, scoped, tag = 'internal scratch']
  %s0 = inlined_call_operand.hbm [shape: bf16[4,16,32], index: 0, kind: input, shape index: {}]
  %s1 = inlined_call_operand.hbm [shape: bf16[4,32,128], index: 1, kind: input, shape index: {}]
  %s2 = inlined_call_operand.vmem [shape: f32[4,1,128], index: 2, kind: input, shape index: {}]
  %s3 = inlined_call_operand.hbm [shape: f32[4,16,128], index: 3, kind: output, shape index: {}]
  %s4 = sld [smem:[#allocation0]]
  $region53: #{tpu_custom_call.1} parent=0
    _
  %s6 = ssub.s32 1, %s4
  %s7 = scalar_select 0, %s6, %s4
  $region1: #{tpu_custom_call.1} parent=0
    #allocation2 [shape = 'u8[8192]{0}', space=vmem, size = 0x2000, scoped, tag = 'input window, operand 0']
    #allocation3 [shape = 's32[2]{0}', space=sflag, size = 0x8, scoped, tag = 'scoped memory for tpu_custom_call.1']
    #allocation4 [shape = 's32[2]{0}', space=sflag, size = 0x8, scoped, tag = 'scoped memory for tpu_custom_call.1']
    #allocation5 [shape = 'u8[16384]{0}', space=vmem, size = 0x4000, scoped, tag = 'input window, operand 1']
    #allocation6 [shape = 's32[2]{0}', space=sflag, size = 0x8, scoped, tag = 'scoped memory for tpu_custom_call.1']
    #allocation7 [shape = 'u8[16384]{0}', space=vmem, size = 0x4000, scoped, tag = 'output window, operand 0']
    %8 = vsyncpa [#allocation3], 0
    %s9 = scalar_lea.sflag [#allocation3], 1
    %10 = vsyncpa %s9, 0
    %11 = vsyncpa [#allocation6], 0
    %s12 = scalar_lea.sflag [#allocation6], 1
    %13 = vsyncpa %s12, 0
    %14 = vsyncpa [#allocation4], 0
    %s15 = scalar_lea.sflag [#allocation4], 1
    %16 = vsyncpa %s15, 0
    loop: start=0, step=1, limit=6
    $region2: #{tpu_custom_call.1} parent=1 // loop_pre_header
      _
    $region3: #{tpu_custom_call.1} parent=1 // loop_header
      %s18 = sphi 0, %s22
      %p19 = scmp.ge.s32.totalorder %s18, 6
      %s25 = sphi 0, %s37
      %s26 = sphi 0, %s33
      %s27 = sphi 0, %s25
      %s28 = sphi 0, %s26
      %s29 = sphi 0, %s27
      %s30 = sphi 0, %s28
      %s42 = sphi 0, %s44
      %s45 = sphi 0, %s42
      %s46 = sphi 0, %s45
      %s62 = sphi 0, %s46
      %s68 = sphi 0, %s70
      %s71 = sphi 0, %s68
      %s72 = sphi 0, %s71
      %s88 = sphi 0, %s72
      %s94 = sphi 0, %s96
      %s97 = sphi 0, %s94
      %s98 = sphi 0, %s97
      %s114 = sphi 0, %s98
      %s122 = sphi 0, %s124
      %s125 = sphi 0, %s122
      %s126 = sphi 0, %s125
      %s142 = sphi 0, %s126
    $region4: #{tpu_custom_call.1} parent=1 // loop_header_branch
      %21 = sbr.rel (%p19) target = $region8
    $region5: #{tpu_custom_call.1} parent=1 // loop_body
      %s23 = ssub.s32 %s18, 1
      %s24 = ssub.s32 %s18, 2
      %s31 = sadd.s32 1, %s26
      %p32 = scmp.ge.s32.totalorder %s31, 1
      %s33 = scalar_select %p32, 0, %s31
      %s34 = sadd.s32 1, %s25
      %s35 = scalar_select %p32, %s34, %s25
      %p36 = scmp.ge.s32.totalorder %s35, 4
      %s37 = scalar_select %p36, 0, %s35
      %s38 = ssub.s32 %s25, %s37
      %s39 = ssub.s32 %s26, %s33
      %s40 = sor.u32 %s38, %s39
      %p41 = scmp.eq.s32.totalorder %s40, 0
      %s43 = sadd.s32 %s42, 1
      %s44 = scalar_select %p41, %s42, %s43
      %p47 = pneg %p41
      %p48 = scmp.eq.s32.totalorder %s18, 3
      %p49 = por %p47, %p48
      %p50 = scmp.ne.s32.totalorder %s42, %s45
      %p51 = scmp.eq.s32.totalorder %s18, 0
      %p52 = por %p50, %p51
      %p53 = scmp.ne.s32.totalorder %s42, %s45
      %p54 = scmp.eq.s32.totalorder %s23, 3
      %p55 = por %p53, %p54
      %p56 = scmp.ne.s32.totalorder %s45, %s46
      %p57 = scmp.eq.s32.totalorder %s23, 0
      %p58 = por %p56, %p57
      %p59 = scmp.ne.s32.totalorder %s45, %s46
      %p60 = scmp.eq.s32.totalorder %s24, 3
      %p61 = por %p59, %p60
      %p63 = scmp.ne.s32.totalorder %s46, %s62
      %p64 = scmp.eq.s32.totalorder %s24, 0
      %p65 = por %p63, %p64
      %s66 = ssub.s32 %s25, %s37
      %p67 = scmp.eq.s32.totalorder %s66, 0
      %s69 = sadd.s32 %s68, 1
      %s70 = scalar_select %p67, %s68, %s69
      %p73 = pneg %p67
      %p74 = scmp.eq.s32.totalorder %s18, 3
      %p75 = por %p73, %p74
      %p76 = scmp.ne.s32.totalorder %s68, %s71
      %p77 = scmp.eq.s32.totalorder %s18, 0
      %p78 = por %p76, %p77
      %p79 = scmp.ne.s32.totalorder %s68, %s71
      %p80 = scmp.eq.s32.totalorder %s23, 3
      %p81 = por %p79, %p80
      %p82 = scmp.ne.s32.totalorder %s71, %s72
      %p83 = scmp.eq.s32.totalorder %s23, 0
      %p84 = por %p82, %p83
      %p85 = scmp.ne.s32.totalorder %s71, %s72
      %p86 = scmp.eq.s32.totalorder %s24, 3
      %p87 = por %p85, %p86
      %p89 = scmp.ne.s32.totalorder %s72, %s88
      %p90 = scmp.eq.s32.totalorder %s24, 0
      %p91 = por %p89, %p90
      %s92 = ssub.s32 %s25, %s37
      %p93 = scmp.eq.s32.totalorder %s92, 0
      %s95 = sadd.s32 %s94, 1
      %s96 = scalar_select %p93, %s94, %s95
      %p99 = pneg %p93
      %p100 = scmp.eq.s32.totalorder %s18, 3
      %p101 = por %p99, %p100
      %p102 = scmp.ne.s32.totalorder %s94, %s97
      %p103 = scmp.eq.s32.totalorder %s18, 0
      %p104 = por %p102, %p103
      %p105 = scmp.ne.s32.totalorder %s94, %s97
      %p106 = scmp.eq.s32.totalorder %s23, 3
      %p107 = por %p105, %p106
      %p108 = scmp.ne.s32.totalorder %s97, %s98
      %p109 = scmp.eq.s32.totalorder %s23, 0
      %p110 = por %p108, %p109
      %p111 = scmp.ne.s32.totalorder %s97, %s98
      %p112 = scmp.eq.s32.totalorder %s24, 3
      %p113 = por %p111, %p112
      %p115 = scmp.ne.s32.totalorder %s98, %s114
      %p116 = scmp.eq.s32.totalorder %s24, 0
      %p117 = por %p115, %p116
      %s118 = ssub.s32 %s25, %s37
      %s119 = ssub.s32 %s26, %s33
      %s120 = sor.u32 %s118, %s119
      %p121 = scmp.eq.s32.totalorder %s120, 0
      %s123 = sadd.s32 %s122, 1
      %s124 = scalar_select %p121, %s122, %s123
      %p127 = pneg %p121
      %p128 = scmp.eq.s32.totalorder %s18, 3
      %p129 = por %p127, %p128
      %p130 = scmp.ne.s32.totalorder %s122, %s125
      %p131 = scmp.eq.s32.totalorder %s18, 0
      %p132 = por %p130, %p131
      %p133 = scmp.ne.s32.totalorder %s122, %s125
      %p134 = scmp.eq.s32.totalorder %s23, 3
      %p135 = por %p133, %p134
      %p136 = scmp.ne.s32.totalorder %s125, %s126
      %p137 = scmp.eq.s32.totalorder %s23, 0
      %p138 = por %p136, %p137
      %p139 = scmp.ne.s32.totalorder %s125, %s126
      %p140 = scmp.eq.s32.totalorder %s24, 3
      %p141 = por %p139, %p140
      %p143 = scmp.ne.s32.totalorder %s126, %s142
      %p144 = scmp.eq.s32.totalorder %s24, 0
      %p145 = por %p143, %p144
      %p146 = scmp.le.s32.totalorder 1, %s18
      %p147 = scmp.lt.s32.totalorder %s18, 5
      %p148 = pnand %p146, %p147
      %p149 = pneg %p148
      // Predicated region
      $region9: #{tpu_custom_call.1} parent=5 // pred_check
        _
      $region10: #{tpu_custom_call.1} parent=5 // pred_check_branch
        %151 = sbr.rel (%p148) target = $region12
      $region11: #{tpu_custom_call.1} parent=5 // pred_region
        %s152 = ssub.s32 %s18, 1
      $region12: #{tpu_custom_call.1} parent=5 // pred_fallthru
        _
      %p153 = scmp.lt.s32.totalorder %s18, 4
      // Predicated region
      $region13: #{tpu_custom_call.1} parent=5 // pred_check
        %p154 = pneg %p153
      $region14: #{tpu_custom_call.1} parent=5 // pred_check_branch
        %156 = sbr.rel (%p154) target = $region16
      $region15: #{tpu_custom_call.1} parent=5 // pred_region
        // Predicated region
        $region17: #{tpu_custom_call.1} parent=15 // pred_check
          %p157 = pneg %p52
        $region18: #{tpu_custom_call.1} parent=15 // pred_check_branch
          %159 = sbr.rel (%p157) target = $region20
        $region19: #{tpu_custom_call.1} parent=15 // pred_region
          %s160 = sand.u32 %s42, 1
          %s161 = scalar_lea.sflag [#allocation3], %s160
          %s162 = sand.u32 %s42, 1
          %s163 = smul.addr %s162, 8
          %s164 = scalar_lea.vmem [#allocation2], %s163
          %s165 = smul.u32 2, %s26
          %s167 = ssub.s32 128, 128
          %168 = vsyncadd %s161, %s167
          %s169 = smul.addr %s25, 2
          %s170 = sadd.s32 %s165, %s169
          %s171 = smul.addr %s170, 64
          %s172 = scalar_lea.hbm %s0, %s171
          %s173 = sshll.u32 %s164, 4
          %s174 = int_to_ptr.vmem [resolvable:$true] %s173
          %179 = dma.hbm_to_vmem [thread:$0]  %s172, 128, %s174, %s161, 64, 64, 4
        $region20: #{tpu_custom_call.1} parent=15 // pred_fallthru
          _
        // Predicated region
        $region21: #{tpu_custom_call.1} parent=15 // pred_check
          %p180 = pneg %p78
        $region22: #{tpu_custom_call.1} parent=15 // pred_check_branch
          %182 = sbr.rel (%p180) target = $region24
        $region23: #{tpu_custom_call.1} parent=15 // pred_region
          %s183 = sand.u32 %s68, 1
          %s184 = scalar_lea.sflag [#allocation6], %s183
          %s185 = sand.u32 %s68, 1
          %s186 = smul.addr %s185, 16
          %s187 = scalar_lea.vmem [#allocation5], %s186
          %s189 = ssub.s32 256, 256
          %190 = vsyncadd %s184, %s189
          %s191 = smul.addr %s25, 4
          %s192 = smul.addr %s191, 64
          %s193 = scalar_lea.hbm %s1, %s192
          %s194 = sshll.u32 %s187, 4
          %s195 = int_to_ptr.vmem [resolvable:$true] %s194
          %200 = dma.hbm_to_vmem [thread:$0]  %s193, 256, %s195, %s184, 64, 64, 4
        $region24: #{tpu_custom_call.1} parent=15 // pred_fallthru
          _
        // Predicated region
        $region25: #{tpu_custom_call.1} parent=15 // pred_check
          %p201 = pneg %p104
        $region26: #{tpu_custom_call.1} parent=15 // pred_check_branch
          %203 = sbr.rel (%p201) target = $region28
        $region27: #{tpu_custom_call.1} parent=15 // pred_region
          %p204 = scmp.lt.s32.totalorder %s25, 3
          %s205 = scalar_select %p204, %s25, 3
          %s206 = scalar_lea.vmem %s2, %s205
        $region28: #{tpu_custom_call.1} parent=15 // pred_fallthru
          _
      $region16: #{tpu_custom_call.1} parent=5 // pred_fallthru
        _
      %p207 = scmp.le.s32.totalorder 1, %s18
      %p208 = scmp.lt.s32.totalorder %s18, 5
      %p209 = pnand %p207, %p208
      %p210 = pneg %p209
      // Predicated region
      $region29: #{tpu_custom_call.1} parent=5 // pred_check
        _
      $region30: #{tpu_custom_call.1} parent=5 // pred_check_branch
        %212 = sbr.rel (%p209) target = $region32
      $region31: #{tpu_custom_call.1} parent=5 // pred_region
        %s213 = ssub.s32 %s18, 1
        %s214 = sand.u32 %s45, 1
        %s215 = scalar_lea.sflag [#allocation3], %s214
        %s216 = sand.u32 %s45, 1
        %s217 = smul.addr %s216, 8
        %s218 = scalar_lea.vmem [#allocation2], %s217
        // Predicated region
        $region33: #{tpu_custom_call.1} parent=31 // pred_check
          %p219 = pneg %p58
        $region34: #{tpu_custom_call.1} parent=31 // pred_check_branch
          %221 = sbr.rel (%p219) target = $region36
        $region35: #{tpu_custom_call.1} parent=31 // pred_region
          %222 = dma.done %s215, 128
        $region36: #{tpu_custom_call.1} parent=31 // pred_fallthru
          _
        %s223 = sand.u32 %s71, 1
        %s224 = scalar_lea.sflag [#allocation6], %s223
        %s225 = sand.u32 %s71, 1
        %s226 = smul.addr %s225, 16
        %s227 = scalar_lea.vmem [#allocation5], %s226
        // Predicated region
        $region37: #{tpu_custom_call.1} parent=31 // pred_check
          %p228 = pneg %p84
        $region38: #{tpu_custom_call.1} parent=31 // pred_check_branch
          %230 = sbr.rel (%p228) target = $region40
        $region39: #{tpu_custom_call.1} parent=31 // pred_region
          %231 = dma.done %s224, 256
        $region40: #{tpu_custom_call.1} parent=31 // pred_fallthru
          _
        %s232 = sand.u32 %s45, 1
        %s233 = scalar_lea.sflag [#allocation3], %s232
        %s234 = sand.u32 %s45, 1
        %s235 = smul.addr %s234, 8
        %s236 = scalar_lea.vmem [#allocation2], %s235
        %p237 = pneg %p58
        %p238 = pneg %p55
        %s239 = sand.u32 %s71, 1
        %s240 = scalar_lea.sflag [#allocation6], %s239
        %s241 = sand.u32 %s71, 1
        %s242 = smul.addr %s241, 16
        %s243 = scalar_lea.vmem [#allocation5], %s242
        %p244 = pneg %p84
        %p245 = pneg %p81
        %p246 = scmp.lt.s32.totalorder %s27, 3
        %s247 = scalar_select %p246, %s27, 3
        %s248 = scalar_lea.vmem %s2, %s247
        %p249 = pneg %p110
        %p250 = pneg %p107
        %p251 = pneg %p138
        %p252 = pneg %p135
        %s253 = sand.u32 %s125, 1
        %s254 = scalar_lea.sflag [#allocation4], %s253
        %s255 = sand.u32 %s125, 1
        %s256 = smul.addr %s255, 16
        %s257 = scalar_lea.vmem [#allocation7], %s256
        %s258 = smul.u32 2, %s28
        %p259 = scmp.lt.s32.totalorder %s27, 3
        %s260 = scalar_select %p259, %s27, 3
        %s261 = scalar_lea.vmem %s2, %s260
        %s262 = smul.u32 2, %s28
        %v264 = vld [vmem:[%s218] sm:$0xf]
        %v265 = vld [vmem:[%s218 + $0x4] sm:$0xf]
        %v266 = vld [vmem:[%s227] sm:$0xf]
        %v267 = vld [vmem:[%s227 + $0x4] sm:$0xf]
        %v268 = vld [vmem:[%s227 + $0x8] sm:$0xf]
        %v269 = vld [vmem:[%s227 + $0xc] sm:$0xf]
        %v270 = vld [vmem:[%s261] sm:$0x1]
        %v272 = vlaneseq
        %v273 = vshrl.u32 %v272, 7
        %v274 = vsub.s32 0, %v273
        %v275 = vrot.slane %v270, %v274
        %v279 = vunpack.c.l.b16 %v264
        %v280 = vunpack.c.l.b16 %v265
        %v281 = vpack.c.b16 %v280, %v279
        %v286 = vunpack.c.l.b16 %v266
        %v287 = vunpack.c.l.b16 %v267
        %v288 = vunpack.c.l.b16 %v268
        %v289 = vunpack.c.l.b16 %v269
        %v290 = vpack.c.b16 %v287, %v286
        %v291 = vpack.c.b16 %v289, %v288
        %vm294 = vcmask 261120
        %v296 = vsel %vm294, %v281, 0
        %298 = vmatprep.subr.bf16.mxu0 0
        %299 = vmatpush1.bf16.msra.mxu0 %v290
        %300 = vmatprep.subr.bf16.mxu0 0
        %301 = vmatpush1.bf16.msra.mxu0 %v291
        %302 = vmatprep.subr.bf16.mxu0 0
        %303 = vmatpush1.bf16.msra.mxu0 0
        %304 = vmatprep.subr.bf16.mxu0 0
        %305 = vmatpush1.bf16.msra.mxu0 0
        %306 = vmatprep.subr.bf16.mxu0 0
        %307 = vmatpush1.bf16.msra.mxu0 0
        %308 = vmatprep.subr.bf16.mxu0 0
        %309 = vmatpush1.bf16.msra.mxu0 0
        %310 = vmatprep.subr.bf16.mxu0 0
        %311 = vmatpush1.bf16.msra.mxu0 0
        %312 = vmatprep.subr.bf16.mxu0 0
        %313 = vmatpush1.bf16.msra.mxu0 0
        %314 = vmatprep.subr.bf16.mxu0 0
        %315 = vmatpush1.bf16.msra.mxu0 0
        %316 = vmatprep.subr.bf16.mxu0 0
        %317 = vmatpush1.bf16.msra.mxu0 0
        %318 = vmatprep.subr.bf16.mxu0 0
        %319 = vmatpush1.bf16.msra.mxu0 0
        %320 = vmatprep.subr.bf16.mxu0 0
        %321 = vmatpush1.bf16.msra.mxu0 0
        %322 = vmatprep.subr.bf16.mxu0 0
        %323 = vmatpush1.bf16.msra.mxu0 0
        %324 = vmatprep.subr.bf16.mxu0 0
        %325 = vmatpush1.bf16.msra.mxu0 0
        %326 = vmatprep.subr.bf16.mxu0 0
        %327 = vmatpush1.bf16.msra.mxu0 0
        %328 = vmatprep.subr.bf16.mxu0 0
        %329 = vmatpush1.bf16.msra.mxu0 0
        %330 = vmatprep.mubr.bf16.mxu0 0
        %331 = vmatmul.mubr.bf16.gmra.mrb[0].mxu0 %v296
        %v332 = vpop.f32.mrb[0].mxu0
        %v333 = vadd.f32 %v275, %v332
        %v334 = vpop.f32.mrb[0].mxu0
        %v335 = vpop.f32.mrb[0].mxu0
        %v336 = vadd.f32 %v275, %v335
        %v337 = vpop.f32.mrb[0].mxu0
        %338 = vdwg.mxu0
        %339 = vmax.xlane.f32.xlu0 %v333
        %v340 = vpop.xlane.xlu0 %339
        %341 = vmax.xlane.f32.xlu0 %v336
        %v342 = vpop.xlane.xlu0 %341
        %v343 = vsub.f32 %v333, %v340
        %v344 = vsub.f32 %v336, %v342
        %v345 = vmul.f32 %v343, 1.442695
        %v346 = vpow.pop %v345
        %v347 = vmul.f32 %v344, 1.442695
        %v348 = vpow.pop %v347
        %349 = vadd.xlane.f32.xlu0 %v346
        %v350 = vpop.xlane.xlu0 %349
        %351 = vadd.xlane.f32.xlu0 %v348
        %v352 = vpop.xlane.xlu0 %351
        %v353 = vlog2.pop %v350
        %v354 = vmul.f32 %v353, 0.6931472
        %v355 = vlog2.pop %v352
        %v356 = vmul.f32 %v355, 0.6931472
        %v357 = vsub.f32 %v343, %v354
        %v358 = vsub.f32 %v344, %v356
        %359 = vst [vmem:[%s257] sm:$0xff] %v357
        %360 = vst [vmem:[%s257 + $0x8] sm:$0xff] %v358
        %s361 = sand.u32 %s125, 1
        %s362 = scalar_lea.sflag [#allocation4], %s361
        %s363 = sand.u32 %s125, 1
        %s364 = smul.addr %s363, 16
        %s365 = scalar_lea.vmem [#allocation7], %s364
        // Predicated region
        $region41: #{tpu_custom_call.1} parent=31 // pred_check
          %p366 = pneg %p135
        $region42: #{tpu_custom_call.1} parent=31 // pred_check_branch
          %368 = sbr.rel (%p366) target = $region44
        $region43: #{tpu_custom_call.1} parent=31 // pred_region
          %s369 = smul.u32 2, %s28
          %s371 = ssub.s32 256, 256
          %372 = vsyncadd %s362, %s371
          %s373 = smul.addr %s27, 2
          %s374 = sadd.s32 %s369, %s373
          %s375 = smul.addr %s374, 128
          %s376 = scalar_lea.hbm %s3, %s375
          %s377 = sshll.u32 %s365, 4
          %s378 = int_to_ptr.vmem [resolvable:$true] %s377
          %383 = dma.vmem_to_hbm [thread:$0]  %s378, 256, %s376, %s362, 128, 128, 8
        $region44: #{tpu_custom_call.1} parent=31 // pred_fallthru
          _
      $region32: #{tpu_custom_call.1} parent=5 // pred_fallthru
        _
      %p384 = scmp.le.s32.totalorder 2, %s18
      // Predicated region
      $region45: #{tpu_custom_call.1} parent=5 // pred_check
        %p385 = pneg %p384
      $region46: #{tpu_custom_call.1} parent=5 // pred_check_branch
        %387 = sbr.rel (%p385) target = $region48
      $region47: #{tpu_custom_call.1} parent=5 // pred_region
        %s388 = ssub.s32 %s18, 2
        // Predicated region
        $region49: #{tpu_custom_call.1} parent=47 // pred_check
          %p389 = pneg %p141
        $region50: #{tpu_custom_call.1} parent=47 // pred_check_branch
          %391 = sbr.rel (%p389) target = $region52
        $region51: #{tpu_custom_call.1} parent=47 // pred_region
          %s392 = sand.u32 %s126, 1
          %s393 = scalar_lea.sflag [#allocation4], %s392
          %s394 = sand.u32 %s126, 1
          %s395 = smul.addr %s394, 16
          %s396 = scalar_lea.vmem [#allocation7], %s395
          %397 = dma.done %s393, 256
        $region52: #{tpu_custom_call.1} parent=47 // pred_fallthru
          _
      $region48: #{tpu_custom_call.1} parent=5 // pred_fallthru
        _
    $region6: #{tpu_custom_call.1} parent=1 // loop_footer
      %s22 = sadd.s32 1, %s18
    $region7: #{tpu_custom_call.1} parent=1 // loop_footer_branch
      %17 = sbr.rel target = $region3
    $region8: #{tpu_custom_call.1} parent=1 // loop_exit
      _
    %398 = vsyncpa [#allocation3], 1
    %s399 = scalar_lea.sflag [#allocation3], 1
    %400 = vsyncpa %s399, 1
    %401 = vsyncpa [#allocation6], 1
    %s402 = scalar_lea.sflag [#allocation6], 1
    %403 = vsyncpa %s402, 1
    %404 = vsyncpa [#allocation4], 1
    %s405 = scalar_lea.sflag [#allocation4], 1
    %406 = vsyncpa %s405, 1

</llo_original>
